<compile_context>
chip_gen: v6e
topology: v6e:2x2x1
jax: 0.10.0
libtpu: 0.0.40
codegen_flags: <defaults>
</compile_context>

<pallas_src>
import jax
import jax.numpy as jnp
from jax.experimental import pallas as pl
from jax.experimental.pallas import tpu as pltpu


def se_block_kernel(x_ref, w1_ref, b1_ref, w2_ref, b2_ref, o_ref):
    x = x_ref[...]                                             # (TB, C), I/O dtype
    # linear_1 on the MXU with f32 accumulation, then bias + ReLU in f32.
    h = jnp.dot(x, w1_ref[...], preferred_element_type=jnp.float32)
    h = jnp.maximum(h + b1_ref[...].astype(jnp.float32), 0.0)  # (TB, H)
    # linear_2 on the MXU (operands in the weight dtype), f32 accumulation.
    y = jnp.dot(h.astype(w2_ref.dtype), w2_ref[...],
                preferred_element_type=jnp.float32)
    s = jax.nn.sigmoid(y + b2_ref[...].astype(jnp.float32))    # exp on the EUP
    # Gate in the I/O dtype: bf16 VALU on v6e/v7x, neutral on v5e.
    o_ref[...] = (x * s.astype(x.dtype)).astype(o_ref.dtype)


def se_block(x, w1, b1, w2, b2, *, tb=None,
             vmem_budget_bytes=44 * 1024 * 1024, interpret=False):
    """x: (B, C); w1: (C, H); b1: (1, H); w2: (H, C); b2: (1, C). H = C // r."""
    B, C = x.shape
    Cw, H = w1.shape
    assert Cw == C and w2.shape == (H, C)
    b1 = b1.reshape(1, H)
    b2 = b2.reshape(1, C)

    io_dtype = x.dtype
    itemsize = jnp.dtype(io_dtype).itemsize
    sublane = max(8, 32 // itemsize)          # 8 f32, 16 bf16, 32 int8/fp8

    # --- Lane-dense packing for small C ------------------------------------
    # Fold `pack` batch rows into one (pack*C == 128)-lane row so stores are
    # unmasked full-lane vst's. Weights become block-diagonal copies (still
    # tiny and VMEM-resident); HBM traffic for x/out is unchanged.
    pack = 1
    if C < 128 and 128 % C == 0:
        pack = 128 // C

    if pack > 1:
        Bp = pl.cdiv(B, pack) * pack
        x_in = jnp.pad(x, ((0, Bp - B), (0, 0))) if Bp != B else x
        x_in = x_in.reshape(Bp // pack, pack * C)
        w1_in = jnp.kron(jnp.eye(pack, dtype=w1.dtype), w1)    # (pack*C, pack*H)
        w2_in = jnp.kron(jnp.eye(pack, dtype=w2.dtype), w2)    # (pack*H, pack*C)
        b1_in = jnp.tile(b1, (1, pack))
        b2_in = jnp.tile(b2, (1, pack))
        Bi, Ci, Hi = Bp // pack, pack * C, pack * H
    else:
        x_in, w1_in, b1_in, w2_in, b2_in = x, w1, b1, w2, b2
        Bi, Ci, Hi = B, C, H

    # --- Batch tile from the VMEM budget ------------------------------------
    # Working set ~= double-buffered x + out tiles = 4 * tb * Ci * itemsize
    # (weights are tiny and resident). 44 MiB keeps v7x's 64 MiB/TC happy and
    # leaves lots of headroom on v5e/v6e's 128 MiB.
    if tb is None:
        tb = max(1, vmem_budget_bytes // (4 * Ci * itemsize))
    tb = min(tb, Bi)
    if tb < Bi:
        tb = max(sublane, (tb // sublane) * sublane)   # dtype-aware sublane align
    grid = (pl.cdiv(Bi, tb),)

    w_bytes = jnp.dtype(w1.dtype).itemsize
    cost = pl.CostEstimate(
        flops=4 * Bi * Ci * Hi,                       # two matmuls
        transcendentals=Bi * Ci,                      # sigmoid
        bytes_accessed=2 * Bi * Ci * itemsize + (2 * Ci * Hi + Hi + Ci) * w_bytes,
    )

    out = pl.pallas_call(
        se_block_kernel,
        out_shape=jax.ShapeDtypeStruct((Bi, Ci), io_dtype),
        grid=grid,
        in_specs=[
            pl.BlockSpec((tb, Ci), lambda i: (i, 0)),   # x: streamed batch tiles
            pl.BlockSpec((Ci, Hi), lambda i: (0, 0)),   # w1: VMEM-resident
            pl.BlockSpec((1, Hi), lambda i: (0, 0)),    # b1: VMEM-resident
            pl.BlockSpec((Hi, Ci), lambda i: (0, 0)),   # w2: VMEM-resident
            pl.BlockSpec((1, Ci), lambda i: (0, 0)),    # b2: VMEM-resident
        ],
        out_specs=pl.BlockSpec((tb, Ci), lambda i: (i, 0)),
        compiler_params=pltpu.CompilerParams(
            dimension_semantics=("parallel",),          # shard batch tiles across TCs
            vmem_limit_bytes=56 * 1024 * 1024,          # > default scoped, < v7x 64 MiB
        ),
        cost_estimate=cost,
        interpret=interpret,
    )(x_in, w1_in, b1_in, w2_in, b2_in)

    if pack > 1:
        out = out.reshape(-1, C)[:B]
    return out


def init_params(key, in_ch, r=8, dtype=jnp.float32):
    """Deterministic init mimicking nn.Linear defaults (uniform +-1/sqrt(fan_in)).

    Weights are stored pre-transposed to (in, out) for the kernel.
    """
    hid = in_ch // r
    k1, k2, k3, k4 = jax.random.split(key, 4)
    bound1 = 1.0 / jnp.sqrt(in_ch)
    bound2 = 1.0 / jnp.sqrt(hid)
    w1 = jax.random.uniform(k1, (in_ch, hid), dtype, -bound1, bound1)
    b1 = jax.random.uniform(k2, (1, hid), dtype, -bound1, bound1)
    w2 = jax.random.uniform(k3, (hid, in_ch), dtype, -bound2, bound2)
    b2 = jax.random.uniform(k4, (1, in_ch), dtype, -bound2, bound2)
    return w1, b1, w2, b2


if __name__ == "__main__":
    key = jax.random.PRNGKey(0)
    kx, kp = jax.random.split(key)

    B, C, R = 8, 32, 8                       # small demo shapes; hidden = 4
    x = jax.random.normal(kx, (B, C), jnp.float32)
    w1, b1, w2, b2 = init_params(kp, C, R)

    out = jax.block_until_ready(se_block(x, w1, b1, w2, b2))

    # Reference check in plain JAX (same math as the PyTorch forward).
    h_ref = jnp.maximum(x @ w1 + b1, 0.0)
    ref = x * jax.nn.sigmoid(h_ref @ w2 + b2)
    assert out.shape == ref.shape
    assert jnp.allclose(out, ref, atol=1e-5, rtol=1e-5), "mismatch vs reference"

    print("KERNEL_OK")
</pallas_src>

<mosaic_0001>
module attributes {stable_mosaic.version = 11 : i64} {
  func.func @se_block_kernel(%arg0: i32, %arg1: memref<2x128xf32, #tpu.memory_space<vmem>>, %arg2: memref<128x16xf32, #tpu.memory_space<vmem>>, %arg3: memref<1x16xf32, #tpu.memory_space<vmem>>, %arg4: memref<16x128xf32, #tpu.memory_space<vmem>>, %arg5: memref<1x128xf32, #tpu.memory_space<vmem>>, %arg6: memref<2x128xf32, #tpu.memory_space<vmem>>) attributes {dimension_semantics = [#tpu.dimension_semantics<parallel>], iteration_bounds = array<i64: 1>, scalar_prefetch = 0 : i64, scratch_operands = 0 : i64, tpu.core_type = #tpu.core_type<tc>, window_params = [{transform_indices = @transform_0, window_bounds = array<i64: 2, 128>}, {pipeline_mode = #tpu.pipeline_mode<synchronous>, transform_indices = @transform_1, window_bounds = array<i64: 128, 16>}, {pipeline_mode = #tpu.pipeline_mode<synchronous>, transform_indices = @transform_2, window_bounds = array<i64: 1, 16>}, {pipeline_mode = #tpu.pipeline_mode<synchronous>, transform_indices = @transform_3, window_bounds = array<i64: 16, 128>}, {pipeline_mode = #tpu.pipeline_mode<synchronous>, transform_indices = @transform_4, window_bounds = array<i64: 1, 128>}, {transform_indices = @transform_5, window_bounds = array<i64: 2, 128>}]} {
    %c0 = arith.constant 0 : index
    %c0_0 = arith.constant 0 : index
    %0 = vector.load %arg1[%c0, %c0_0] : memref<2x128xf32, #tpu.memory_space<vmem>>, vector<2x128xf32>
    %c0_1 = arith.constant 0 : index
    %c0_2 = arith.constant 0 : index
    %1 = vector.load %arg2[%c0_1, %c0_2] : memref<128x16xf32, #tpu.memory_space<vmem>>, vector<128x16xf32>
    %cst = arith.constant dense<0.000000e+00> : vector<2x16xf32>
    %2 = tpu.matmul %0, %1, %cst {dimension_numbers = #tpu.dot_dimension_numbers<[1], [0], [0], [1], [0, 0, 1, 1], [], []>} : vector<2x128xf32>, vector<128x16xf32>, vector<2x16xf32> -> vector<2x16xf32>
    %c0_3 = arith.constant 0 : index
    %c0_4 = arith.constant 0 : index
    %3 = vector.load %arg3[%c0_3, %c0_4] : memref<1x16xf32, #tpu.memory_space<vmem>>, vector<1x16xf32>
    %4 = vector.broadcast %3 : vector<1x16xf32> to vector<2x16xf32>
    %5 = arith.addf %2, %4 : vector<2x16xf32>
    %cst_5 = arith.constant 0.000000e+00 : f32
    %6 = vector.broadcast %cst_5 : f32 to vector<2x16xf32>
    %7 = arith.maximumf %5, %6 : vector<2x16xf32>
    %c0_6 = arith.constant 0 : index
    %c0_7 = arith.constant 0 : index
    %8 = vector.load %arg4[%c0_6, %c0_7] : memref<16x128xf32, #tpu.memory_space<vmem>>, vector<16x128xf32>
    %cst_8 = arith.constant dense<0.000000e+00> : vector<2x128xf32>
    %9 = tpu.matmul %7, %8, %cst_8 {dimension_numbers = #tpu.dot_dimension_numbers<[1], [0], [0], [1], [0, 0, 1, 1], [], []>} : vector<2x16xf32>, vector<16x128xf32>, vector<2x128xf32> -> vector<2x128xf32>
    %c0_9 = arith.constant 0 : index
    %c0_10 = arith.constant 0 : index
    %10 = vector.load %arg5[%c0_9, %c0_10] : memref<1x128xf32, #tpu.memory_space<vmem>>, vector<1x128xf32>
    %11 = vector.broadcast %10 : vector<1x128xf32> to vector<2x128xf32>
    %12 = arith.addf %9, %11 : vector<2x128xf32>
    %13 = arith.negf %12 : vector<2x128xf32>
    %14 = math.exp %13 : vector<2x128xf32>
    %cst_11 = arith.constant 1.000000e+00 : f32
    %15 = vector.broadcast %cst_11 : f32 to vector<2x128xf32>
    %16 = arith.addf %15, %14 : vector<2x128xf32>
    %17 = arith.divf %15, %16 : vector<2x128xf32>
    %18 = arith.mulf %0, %17 : vector<2x128xf32>
    %c0_12 = arith.constant 0 : index
    %c0_13 = arith.constant 0 : index
    %19 = vector.load %arg6[%c0_12, %c0_13] : memref<2x128xf32, #tpu.memory_space<vmem>>, vector<2x128xf32>
    tpu.vector_store %arg6[%c0_12, %c0_13], %18 {strides = array<i32>} : memref<2x128xf32, #tpu.memory_space<vmem>>, vector<2x128xf32>,
    return
  }
  func.func @transform_0(%arg0: i32) -> (i32, i32) {
    %c0_i32 = arith.constant 0 : i32
    %c0_i32_0 = arith.constant 0 : i32
    return %arg0, %c0_i32 : i32, i32
  }
  func.func @transform_1(%arg0: i32) -> (i32, i32) {
    %c0_i32 = arith.constant 0 : i32
    %c0_i32_0 = arith.constant 0 : i32
    %c0_i32_1 = arith.constant 0 : i32
    return %c0_i32, %c0_i32_0 : i32, i32
  }
  func.func @transform_2(%arg0: i32) -> (i32, i32) {
    %c0_i32 = arith.constant 0 : i32
    %c0_i32_0 = arith.constant 0 : i32
    %c0_i32_1 = arith.constant 0 : i32
    return %c0_i32, %c0_i32_0 : i32, i32
  }
  func.func @transform_3(%arg0: i32) -> (i32, i32) {
    %c0_i32 = arith.constant 0 : i32
    %c0_i32_0 = arith.constant 0 : i32
    %c0_i32_1 = arith.constant 0 : i32
    return %c0_i32, %c0_i32_0 : i32, i32
  }
  func.func @transform_4(%arg0: i32) -> (i32, i32) {
    %c0_i32 = arith.constant 0 : i32
    %c0_i32_0 = arith.constant 0 : i32
    %c0_i32_1 = arith.constant 0 : i32
    return %c0_i32, %c0_i32_0 : i32, i32
  }
  func.func @transform_5(%arg0: i32) -> (i32, i32) {
    %c0_i32 = arith.constant 0 : i32
    %c0_i32_0 = arith.constant 0 : i32
    return %arg0, %c0_i32 : i32, i32
  }
}

</mosaic_0001>

<llo_original>
// kernel: tpu_custom_call.1
$region0: #{tpu_custom_call.1}
  #allocation0 [shape = 'u32[]', space=smem, size = 0x4, offset = 0x4, fixed_abs, tag = 'smem constant byte address 0x4 - core index']
  #allocation1 [shape = 'u32[144,128]{1,0:T(1,128)}', space=vmem, size = 0x12000, scoped, tag = 'internal scratch']
  %s0 = inlined_call_operand.vmem [shape: f32[2,128], index: 0, kind: input, shape index: {}]
  %s1 = inlined_call_operand.vmem [shape: f32[128,16], index: 1, kind: input, shape index: {}]
  %s2 = inlined_call_operand.vmem [shape: f32[1,16], index: 2, kind: input, shape index: {}]
  %s3 = inlined_call_operand.vmem [shape: f32[16,128], index: 3, kind: input, shape index: {}]
  %s4 = inlined_call_operand.vmem [shape: f32[1,128], index: 4, kind: input, shape index: {}]
  %s5 = inlined_call_operand.hbm [shape: f32[2,128], index: 5, kind: output, shape index: {}]
  %s6 = sld [smem:[#allocation0]]
  $region30: #{tpu_custom_call.1} parent=0
    _
  %s8 = ssub.s32 1, %s6
  %s9 = scalar_select 0, %s8, %s6
  $region1: #{tpu_custom_call.1} parent=0
    #allocation2 [shape = 'u8[1024]{0}', space=vmem, size = 0x400, scoped, tag = 'output window, operand 0, single buffered']
    #allocation3 [shape = 's32[1]{0}', space=sflag, size = 0x4, scoped, tag = 'scoped memory for tpu_custom_call.1']
    %10 = vsyncpa [#allocation3], 0
    // Predicated region
    $region2: #{tpu_custom_call.1} parent=1 // pred_check
      _
    $region3: #{tpu_custom_call.1} parent=1 // pred_check_branch
      %12 = sbr.rel (0) target = $region5
    $region4: #{tpu_custom_call.1} parent=1 // pred_region
      _
    $region5: #{tpu_custom_call.1} parent=1 // pred_fallthru
      _
    // Predicated region
    $region6: #{tpu_custom_call.1} parent=1 // pred_check
      _
    $region7: #{tpu_custom_call.1} parent=1 // pred_check_branch
      %14 = sbr.rel (0) target = $region9
    $region8: #{tpu_custom_call.1} parent=1 // pred_region
      _
    $region9: #{tpu_custom_call.1} parent=1 // pred_fallthru
      _
    // Predicated region
    $region10: #{tpu_custom_call.1} parent=1 // pred_check
      _
    $region11: #{tpu_custom_call.1} parent=1 // pred_check_branch
      %16 = sbr.rel (0) target = $region13
    $region12: #{tpu_custom_call.1} parent=1 // pred_region
      _
    $region13: #{tpu_custom_call.1} parent=1 // pred_fallthru
      _
    // Predicated region
    $region14: #{tpu_custom_call.1} parent=1 // pred_check
      _
    $region15: #{tpu_custom_call.1} parent=1 // pred_check_branch
      %18 = sbr.rel (0) target = $region17
    $region16: #{tpu_custom_call.1} parent=1 // pred_region
      _
    $region17: #{tpu_custom_call.1} parent=1 // pred_fallthru
      _
    // Predicated region
    $region18: #{tpu_custom_call.1} parent=1 // pred_check
      _
    $region19: #{tpu_custom_call.1} parent=1 // pred_check_branch
      %20 = sbr.rel (0) target = $region21
    $region20: #{tpu_custom_call.1} parent=1 // pred_region
      _
    $region21: #{tpu_custom_call.1} parent=1 // pred_fallthru
      _
    %v21 = vld [vmem:[%s0] sm:$0x3]
    %v22 = vld [vmem:[%s1] sm:$0xff]
    %v23 = vld [vmem:[%s1 + $0x8] sm:$0xff]
    %v24 = vld [vmem:[%s1 + $0x10] sm:$0xff]
    %v25 = vld [vmem:[%s1 + $0x18] sm:$0xff]
    %v26 = vld [vmem:[%s1 + $0x20] sm:$0xff]
    %v27 = vld [vmem:[%s1 + $0x28] sm:$0xff]
    %v28 = vld [vmem:[%s1 + $0x30] sm:$0xff]
    %v29 = vld [vmem:[%s1 + $0x38] sm:$0xff]
    %v30 = vld [vmem:[%s1 + $0x40] sm:$0xff]
    %v31 = vld [vmem:[%s1 + $0x48] sm:$0xff]
    %v32 = vld [vmem:[%s1 + $0x50] sm:$0xff]
    %v33 = vld [vmem:[%s1 + $0x58] sm:$0xff]
    %v34 = vld [vmem:[%s1 + $0x60] sm:$0xff]
    %v35 = vld [vmem:[%s1 + $0x68] sm:$0xff]
    %v36 = vld [vmem:[%s1 + $0x70] sm:$0xff]
    %v37 = vld [vmem:[%s1 + $0x78] sm:$0xff]
    %v38 = vld [vmem:[%s2] sm:$0x1]
    %v40 = vlaneseq
    %v41 = vshrl.u32 %v40, 7
    %v42 = vsub.s32 0, %v41
    %v43 = vrot.slane %v38, %v42
    %45 = vmatprep.subr.mxu0 0.0
    %46 = vmatpush1.msra.mxu0 %v37
    %47 = vmatprep.subr.mxu0 0.0
    %48 = vmatpush1.msra.mxu0 %v36
    %49 = vmatprep.subr.mxu0 0.0
    %50 = vmatpush1.msra.mxu0 %v35
    %51 = vmatprep.subr.mxu0 0.0
    %52 = vmatpush1.msra.mxu0 %v34
    %53 = vmatprep.subr.mxu0 0.0
    %54 = vmatpush1.msra.mxu0 %v33
    %55 = vmatprep.subr.mxu0 0.0
    %56 = vmatpush1.msra.mxu0 %v32
    %57 = vmatprep.subr.mxu0 0.0
    %58 = vmatpush1.msra.mxu0 %v31
    %59 = vmatprep.subr.mxu0 0.0
    %60 = vmatpush1.msra.mxu0 %v30
    %61 = vmatprep.subr.mxu0 0.0
    %62 = vmatpush1.msra.mxu0 %v29
    %63 = vmatprep.subr.mxu0 0.0
    %64 = vmatpush1.msra.mxu0 %v28
    %65 = vmatprep.subr.mxu0 0.0
    %66 = vmatpush1.msra.mxu0 %v27
    %67 = vmatprep.subr.mxu0 0.0
    %68 = vmatpush1.msra.mxu0 %v26
    %69 = vmatprep.subr.mxu0 0.0
    %70 = vmatpush1.msra.mxu0 %v25
    %71 = vmatprep.subr.mxu0 0.0
    %72 = vmatpush1.msra.mxu0 %v24
    %73 = vmatprep.subr.mxu0 0.0
    %74 = vmatpush1.msra.mxu0 %v23
    %75 = vmatprep.subr.mxu0 0.0
    %76 = vmatpush1.msra.mxu0 %v22
    %77 = vmatprep.subr.mxu0 0.0
    %78 = vmatpush2.msra.mxu0 0.0
    %79 = vmatprep.subr.mxu0 0.0
    %80 = vmatpush2.msra.mxu0 0.0
    %81 = vmatprep.subr.mxu0 0.0
    %82 = vmatpush2.msra.mxu0 0.0
    %83 = vmatprep.subr.mxu0 0.0
    %84 = vmatpush2.msra.mxu0 0.0
    %85 = vmatprep.subr.mxu0 0.0
    %86 = vmatpush2.msra.mxu0 0.0
    %87 = vmatprep.subr.mxu0 0.0
    %88 = vmatpush2.msra.mxu0 0.0
    %89 = vmatprep.subr.mxu0 0.0
    %90 = vmatpush2.msra.mxu0 0.0
    %91 = vmatprep.subr.mxu0 0.0
    %92 = vmatpush2.msra.mxu0 0.0
    %93 = vmatprep.subr.mxu0 0.0
    %94 = vmatpush2.msra.mxu0 0.0
    %95 = vmatprep.subr.mxu0 0.0
    %96 = vmatpush2.msra.mxu0 0.0
    %97 = vmatprep.subr.mxu0 0.0
    %98 = vmatpush2.msra.mxu0 0.0
    %99 = vmatprep.subr.mxu0 0.0
    %100 = vmatpush2.msra.mxu0 0.0
    %101 = vmatprep.subr.mxu0 0.0
    %102 = vmatpush2.msra.mxu0 0.0
    %103 = vmatprep.subr.mxu0 0.0
    %104 = vmatpush2.msra.mxu0 0.0
    %105 = vmatprep.subr.mxu0 0.0
    %106 = vmatpush2.msra.mxu0 0.0
    %107 = vmatprep.subr.mxu0 0.0
    %108 = vmatpush2.msra.mxu0 0.0
    %109 = vmatprep.mubr.f32.mxu0 0.0
    %110 = vmatmul.mubr.f32.gmra.mxu0 %v21
    %v111 = vpop.f32.mrf.mxu0
    %v112 = vadd.f32 %v43, %v111
    %v113 = vpop.f32.mrf.mxu0
    %114 = vdwg.mxu0
    %v115 = vmax.f32 %v112, 0.0
    %v116 = vld [vmem:[%s3] sm:$0xff]
    %v117 = vld [vmem:[%s3 + $0x8] sm:$0xff]
    %v118 = vld [vmem:[%s4] sm:$0x1]
    %v120 = vlaneseq
    %v121 = vshrl.u32 %v120, 7
    %v122 = vsub.s32 0, %v121
    %v123 = vrot.slane %v118, %v122
    %vm125 = vcmask 130048
    %v127 = vsel %vm125, %v115, 0
    %129 = vmatprep.subr.mxu0 0.0
    %130 = vmatpush1.msra.mxu0 0.0
    %131 = vmatprep.subr.mxu0 0.0
    %132 = vmatpush1.msra.mxu0 0.0
    %133 = vmatprep.subr.mxu0 0.0
    %134 = vmatpush1.msra.mxu0 0.0
    %135 = vmatprep.subr.mxu0 0.0
    %136 = vmatpush1.msra.mxu0 0.0
    %137 = vmatprep.subr.mxu0 0.0
    %138 = vmatpush1.msra.mxu0 0.0
    %139 = vmatprep.subr.mxu0 0.0
    %140 = vmatpush1.msra.mxu0 0.0
    %141 = vmatprep.subr.mxu0 0.0
    %142 = vmatpush1.msra.mxu0 0.0
    %143 = vmatprep.subr.mxu0 0.0
    %144 = vmatpush1.msra.mxu0 0.0
    %145 = vmatprep.subr.mxu0 0.0
    %146 = vmatpush1.msra.mxu0 0.0
    %147 = vmatprep.subr.mxu0 0.0
    %148 = vmatpush1.msra.mxu0 0.0
    %149 = vmatprep.subr.mxu0 0.0
    %150 = vmatpush1.msra.mxu0 0.0
    %151 = vmatprep.subr.mxu0 0.0
    %152 = vmatpush1.msra.mxu0 0.0
    %153 = vmatprep.subr.mxu0 0.0
    %154 = vmatpush1.msra.mxu0 0.0
    %155 = vmatprep.subr.mxu0 0.0
    %156 = vmatpush1.msra.mxu0 0.0
    %157 = vmatprep.subr.mxu0 0.0
    %158 = vmatpush1.msra.mxu0 %v117
    %159 = vmatprep.subr.mxu0 0.0
    %160 = vmatpush1.msra.mxu0 %v116
    %161 = vmatprep.subr.mxu0 0.0
    %162 = vmatpush2.msra.mxu0 0.0
    %163 = vmatprep.subr.mxu0 0.0
    %164 = vmatpush2.msra.mxu0 0.0
    %165 = vmatprep.subr.mxu0 0.0
    %166 = vmatpush2.msra.mxu0 0.0
    %167 = vmatprep.subr.mxu0 0.0
    %168 = vmatpush2.msra.mxu0 0.0
    %169 = vmatprep.subr.mxu0 0.0
    %170 = vmatpush2.msra.mxu0 0.0
    %171 = vmatprep.subr.mxu0 0.0
    %172 = vmatpush2.msra.mxu0 0.0
    %173 = vmatprep.subr.mxu0 0.0
    %174 = vmatpush2.msra.mxu0 0.0
    %175 = vmatprep.subr.mxu0 0.0
    %176 = vmatpush2.msra.mxu0 0.0
    %177 = vmatprep.subr.mxu0 0.0
    %178 = vmatpush2.msra.mxu0 0.0
    %179 = vmatprep.subr.mxu0 0.0
    %180 = vmatpush2.msra.mxu0 0.0
    %181 = vmatprep.subr.mxu0 0.0
    %182 = vmatpush2.msra.mxu0 0.0
    %183 = vmatprep.subr.mxu0 0.0
    %184 = vmatpush2.msra.mxu0 0.0
    %185 = vmatprep.subr.mxu0 0.0
    %186 = vmatpush2.msra.mxu0 0.0
    %187 = vmatprep.subr.mxu0 0.0
    %188 = vmatpush2.msra.mxu0 0.0
    %189 = vmatprep.subr.mxu0 0.0
    %190 = vmatpush2.msra.mxu0 0.0
    %191 = vmatprep.subr.mxu0 0.0
    %192 = vmatpush2.msra.mxu0 0.0
    %193 = vmatprep.mubr.f32.mxu0 0.0
    %194 = vmatmul.mubr.f32.gmra.mxu0 %v127
    %v195 = vpop.f32.mrf.mxu0
    %v196 = vadd.f32 %v123, %v195
    %v197 = vpop.f32.mrf.mxu0
    %198 = vdwg.mxu0
    %v199 = vxor.u32 %v196, 2147483648
    %v200 = vmul.f32 %v199, 1.442695
    %v201 = vpow.pop %v200
    %v202 = vadd.f32 %v201, 1.0
    %v203 = vrcp.pop %v202
    %v204 = vmul.f32 1.0, %v203
    %v205 = vmul.f32 %v21, %v204
    %206 = vst [vmem:[#allocation2] sm:$0x3] %v205
    // Predicated region
    $region22: #{tpu_custom_call.1} parent=1 // pred_check
      _
    $region23: #{tpu_custom_call.1} parent=1 // pred_check_branch
      %208 = sbr.rel (0) target = $region25
    $region24: #{tpu_custom_call.1} parent=1 // pred_region
      %s210 = ssub.s32 32, 32
      %211 = vsyncadd [#allocation3], %s210
      %s213 = sshll.u32 [#allocation2], 4
      %s214 = int_to_ptr.vmem [resolvable:$true] %s213
      %216 = dma.vmem_to_hbm [thread:$0]  %s214, 32, %s5, [#allocation3]
    $region25: #{tpu_custom_call.1} parent=1 // pred_fallthru
      _
    // Predicated region
    $region26: #{tpu_custom_call.1} parent=1 // pred_check
      _
    $region27: #{tpu_custom_call.1} parent=1 // pred_check_branch
      %218 = sbr.rel (0) target = $region29
    $region28: #{tpu_custom_call.1} parent=1 // pred_region
      %219 = dma.done [#allocation3], 32
    $region29: #{tpu_custom_call.1} parent=1 // pred_fallthru
      _
    %220 = vsyncpa [#allocation3], 1

</llo_original>
